<compile_context>
chip_gen: v7x
topology: tpu7x:2x2x1
jax: 0.10.0
libtpu: 0.0.40
codegen_flags: <defaults>
</compile_context>

<pallas_src>
import functools
import math

import jax
import jax.numpy as jnp
from jax import lax
from jax.experimental import pallas as pl
from jax.experimental.pallas import tpu as pltpu


def _round_up(x, m):
    return ((x + m - 1) // m) * m


def _choose_tile(dim, target, granularity):
    """Largest tile (multiple of `granularity`, <= `target`) minimizing the
    induced padded extent cdiv(dim, t) * t, restricted to t >= target // 2 so
    awkward dims never collapse to sliver tiles."""
    target = max(int(target), granularity)
    if dim <= target:
        return dim                      # single full-extent block (always legal)
    lo = max(granularity, (target // 2 // granularity) * granularity)
    best_t, best_pad = None, None
    t = lo
    while t <= target:
        pad = _round_up(dim, t)
        if best_pad is None or pad <= best_pad:   # ties -> larger tile
            best_t, best_pad = t, pad
        t += granularity
    return best_t


def _linear_kernel(x_ref, w_ref, b_ref, o_ref, acc_ref, *,
                   k_size, mask_k_tail, cast_to_bf16):
    # x_ref: (tm, tk)   w_ref: (tn, tk) native (out, in) layout   b_ref: (1, tn)
    # o_ref: (tm, tn)   acc_ref: (tm, tn) f32 scratch
    k = pl.program_id(2)

    @pl.when(k == 0)
    def _init():
        acc_ref[...] = jnp.zeros_like(acc_ref)

    x = x_ref[...]
    w = w_ref[...]

    if mask_k_tail:
        # Last k block spills past in_features: its out-of-bounds columns hold
        # unspecified data, so zero them on BOTH operands (masking only one side
        # could still let NaN garbage through via 0 * NaN).
        tk = x_ref.shape[-1]
        col = k * tk + lax.broadcasted_iota(jnp.int32, (1, tk), 1)
        valid = col < k_size
        x = jnp.where(valid, x, 0)
        w = jnp.where(valid, w, 0)

    if cast_to_bf16:
        x = x.astype(jnp.bfloat16)
        w = w.astype(jnp.bfloat16)

    # x @ W^T: contract in_features against the native (out, in) weight layout.
    # Same trans-B dimension_numbers the Pallas flash-attention reference kernel
    # uses for q @ k^T -> lowers straight to the MXU (no per-tile transposes).
    acc_ref[...] += lax.dot_general(
        x, w,
        dimension_numbers=(((1,), (1,)), ((), ())),
        preferred_element_type=jnp.float32)

    @pl.when(k == pl.num_programs(2) - 1)
    def _finalize():
        o_ref[...] = (acc_ref[...] + b_ref[...].astype(jnp.float32)).astype(o_ref.dtype)


def meta_linear(x, weight, bias, *,
                tm_target=512, tn_target=512, tk_target=1024,
                mxu_bf16=False, vmem_limit_bytes=48 << 20):
    """Pallas equivalent of MetaLinear.forward / F.linear(x, weight, bias).

    x:      (..., in_features)
    weight: (out_features, in_features)   -- PyTorch nn.Linear layout
    bias:   (out_features,)
    returns (..., out_features)
    """
    orig_shape = x.shape
    K = orig_shape[-1]
    N = weight.shape[0]
    assert weight.shape[1] == K, "weight must be (out_features, in_features)"

    x2d = x.reshape(-1, K)
    M = x2d.shape[0]
    b2d = bias.reshape(1, N)

    # F.linear-style dtype promotion (don't silently downcast to x.dtype).
    out_dtype = jnp.result_type(x.dtype, weight.dtype, bias.dtype)

    x_item = jnp.dtype(x2d.dtype).itemsize
    w_item = jnp.dtype(weight.dtype).itemsize

    # Lane-dense (128-multiple) N/K tiles; dtype-packing-aligned M tile
    # (8 rows f32, 16 bf16, 32 int8/fp8).
    m_pack = max(8, 32 // x_item)
    tm = _choose_tile(M, tm_target, m_pack)
    tn = _choose_tile(N, tn_target, 128)
    tk = _choose_tile(K, tk_target, 128)

    gm = pl.cdiv(M, tm)
    gn = pl.cdiv(N, tn)
    gk = pl.cdiv(K, tk)

    mask_k_tail = (gk * tk != K)
    cast_to_bf16 = bool(mxu_bf16) and jnp.dtype(x.dtype) == jnp.float32

    # Megacore: put the grid axis to shard across TensorCores first so the
    # operand duplicated across cores is the small one. Shard N when the weight
    # slab dominates (decode-like), M when the activation slab dominates.
    split_n_first = (N * K * w_item) >= (M * K * x_item)
    if split_n_first:
        grid = (gn, gm, gk)
        x_map = lambda j, i, k: (i, k)
        w_map = lambda j, i, k: (j, k)
        b_map = lambda j, i, k: (0, j)
        o_map = lambda j, i, k: (i, j)
    else:
        grid = (gm, gn, gk)
        x_map = lambda i, j, k: (i, k)
        w_map = lambda i, j, k: (j, k)
        b_map = lambda i, j, k: (0, j)
        o_map = lambda i, j, k: (i, j)

    # Single-M-tile (pure weight-streaming) shapes: deepen the weight pipeline.
    if gm == 1 and gk >= 3:
        w_spec = pl.BlockSpec((tn, tk), w_map, pipeline_mode=pl.Buffered(3))
    else:
        w_spec = pl.BlockSpec((tn, tk), w_map)

    # Advisory cost: actual HBM traffic including re-reads (x streamed gn times,
    # W streamed gm times), per-operand itemsize.
    cost = pl.CostEstimate(
        flops=2 * (gm * tm) * (gn * tn) * (gk * tk),
        transcendentals=0,
        bytes_accessed=(M * K * x_item) * gn
        + (N * K * w_item) * gm
        + N * jnp.dtype(bias.dtype).itemsize * gm
        + M * N * jnp.dtype(out_dtype).itemsize,
    )

    kernel = functools.partial(
        _linear_kernel,
        k_size=K, mask_k_tail=mask_k_tail, cast_to_bf16=cast_to_bf16)

    out = pl.pallas_call(
        kernel,
        out_shape=jax.ShapeDtypeStruct((M, N), out_dtype),
        grid_spec=pltpu.PrefetchScalarGridSpec(
            num_scalar_prefetch=0,
            grid=grid,
            in_specs=[
                pl.BlockSpec((tm, tk), x_map),   # activation tile
                w_spec,                          # weight tile, native (out, in)
                pl.BlockSpec((1, tn), b_map),    # bias tile
            ],
            out_specs=pl.BlockSpec((tm, tn), o_map),
            scratch_shapes=[pltpu.VMEM((tm, tn), jnp.float32)],
        ),
        compiler_params=pltpu.CompilerParams(
            dimension_semantics=("parallel", "parallel", "arbitrary"),
            vmem_limit_bytes=vmem_limit_bytes),
        cost_estimate=cost,
    )(x2d, weight, b2d)

    return out.reshape(*orig_shape[:-1], N)


def init_meta_linear_params(key, in_features, out_features, dtype=jnp.float32):
    """Deterministic init mirroring nn.Linear defaults:
    weight ~ kaiming_uniform(a=sqrt(5)) => U(-1/sqrt(fan_in), 1/sqrt(fan_in))
    bias   ~ U(-1/sqrt(fan_in), 1/sqrt(fan_in))
    """
    kw, kb = jax.random.split(key)
    bound = 1.0 / math.sqrt(in_features)
    weight = jax.random.uniform(
        kw, (out_features, in_features), dtype=dtype, minval=-bound, maxval=bound)
    bias = jax.random.uniform(
        kb, (out_features,), dtype=dtype, minval=-bound, maxval=bound)
    return weight, bias


if __name__ == "__main__":
    key = jax.random.PRNGKey(0)
    k_x, k_p, k_x2, k_p2, k_x4, k_p4 = jax.random.split(key, 6)

    # 1) Small shapes matching the module (single block, full-extent tiles).
    batch, in_features, out_features = 8, 32, 64
    x = jax.random.normal(k_x, (batch, in_features), dtype=jnp.float32)
    weight, bias = init_meta_linear_params(k_p, in_features, out_features)
    y = jax.block_until_ready(meta_linear(x, weight, bias))
    y_ref = x @ weight.T + bias
    assert y.shape == (batch, out_features)
    assert jnp.allclose(y, y_ref, atol=1e-5, rtol=1e-5)

    # 2) Non-aligned shapes with leading batch dims (single-block fast path,
    #    no padding anywhere).
    M2, K2, N2 = 130, 200, 300
    x2 = jax.random.normal(k_x2, (2, M2 // 2, K2), dtype=jnp.float32)
    w2, b2 = init_meta_linear_params(k_p2, K2, N2)
    y2 = jax.block_until_ready(meta_linear(x2, w2, b2))
    y2_ref = x2 @ w2.T + b2
    assert y2.shape == (2, M2 // 2, N2)
    assert jnp.allclose(y2, y2_ref, atol=1e-4, rtol=1e-4)

    # 3) Same data with small tile targets: exercises the multi-tile grid, the
    #    out-of-bounds M/N edge blocks (dropped on write) and the in-kernel
    #    K-tail masking (no wrapper-side jnp.pad).
    y3 = jax.block_until_ready(
        meta_linear(x2, w2, b2, tm_target=128, tn_target=128, tk_target=128))
    assert y3.shape == (2, M2 // 2, N2)
    assert jnp.allclose(y3, y2_ref, atol=1e-4, rtol=1e-4)

    # 4) bf16 decode-like shape (single M tile, several K blocks): exercises
    #    dtype-aware sublane packing and the Buffered(3) weight stream.
    M4, K4, N4 = 8, 512, 256
    x4 = jax.random.normal(k_x4, (M4, K4), dtype=jnp.float32).astype(jnp.bfloat16)
    w4f, b4f = init_meta_linear_params(k_p4, K4, N4)
    w4, b4 = w4f.astype(jnp.bfloat16), b4f.astype(jnp.bfloat16)
    y4 = jax.block_until_ready(meta_linear(x4, w4, b4, tk_target=128))
    y4_ref = (x4.astype(jnp.float32) @ w4.T.astype(jnp.float32)
              + b4.astype(jnp.float32)).astype(jnp.bfloat16)
    assert y4.shape == (M4, N4)
    assert jnp.allclose(y4.astype(jnp.float32), y4_ref.astype(jnp.float32),
                        atol=2e-2, rtol=2e-2)

    print("KERNEL_OK")
</pallas_src>

<mosaic_0001>
module attributes {stable_mosaic.version = 11 : i64} {
  func.func @_linear_kernel(%arg0: i32, %arg1: i32, %arg2: i32, %arg3: memref<8x32xf32, #tpu.memory_space<vmem>>, %arg4: memref<64x32xf32, #tpu.memory_space<vmem>>, %arg5: memref<1x64xf32, #tpu.memory_space<vmem>>, %arg6: memref<8x64xf32, #tpu.memory_space<vmem>>, %arg7: memref<8x64xf32, #tpu.memory_space<vmem>>) attributes {dimension_semantics = [#tpu.dimension_semantics<parallel>, #tpu.dimension_semantics<parallel>, #tpu.dimension_semantics<arbitrary>], iteration_bounds = array<i64: 1, 1, 1>, scalar_prefetch = 0 : i64, scratch_operands = 1 : i64, tpu.core_type = #tpu.core_type<tc>, window_params = [{transform_indices = @transform_0, window_bounds = array<i64: 8, 32>}, {transform_indices = @transform_1, window_bounds = array<i64: 64, 32>}, {transform_indices = @transform_2, window_bounds = array<i64: 1, 64>}, {transform_indices = @transform_3, window_bounds = array<i64: 8, 64>}]} {
    %c0_i32 = arith.constant 0 : i32
    %0 = arith.cmpi eq, %arg2, %c0_i32 : i32
    %1 = arith.extui %0 : i1 to i32
    %c0_i32_0 = arith.constant 0 : i32
    %2 = arith.cmpi ne, %1, %c0_i32_0 : i32
    scf.if %2 {
      %cst_10 = arith.constant 0.000000e+00 : f32
      %12 = vector.broadcast %cst_10 : f32 to vector<8x64xf32>
      %c0_11 = arith.constant 0 : index
      %c0_12 = arith.constant 0 : index
      %13 = vector.load %arg7[%c0_11, %c0_12] : memref<8x64xf32, #tpu.memory_space<vmem>>, vector<8x64xf32>
      tpu.vector_store %arg7[%c0_11, %c0_12], %12 {strides = array<i32>} : memref<8x64xf32, #tpu.memory_space<vmem>>, vector<8x64xf32>,
    } else {
    }
    %c0 = arith.constant 0 : index
    %c0_1 = arith.constant 0 : index
    %3 = vector.load %arg3[%c0, %c0_1] : memref<8x32xf32, #tpu.memory_space<vmem>>, vector<8x32xf32>
    %c0_2 = arith.constant 0 : index
    %c0_3 = arith.constant 0 : index
    %4 = vector.load %arg4[%c0_2, %c0_3] : memref<64x32xf32, #tpu.memory_space<vmem>>, vector<64x32xf32>
    %c0_4 = arith.constant 0 : index
    %c0_5 = arith.constant 0 : index
    %5 = vector.load %arg7[%c0_4, %c0_5] : memref<8x64xf32, #tpu.memory_space<vmem>>, vector<8x64xf32>
    %cst = arith.constant dense<0.000000e+00> : vector<8x64xf32>
    %6 = tpu.matmul %3, %4, %cst {dimension_numbers = #tpu.dot_dimension_numbers<[1], [1], [0], [0], [0, 0, 1, 0], [], []>} : vector<8x32xf32>, vector<64x32xf32>, vector<8x64xf32> -> vector<8x64xf32>
    %7 = arith.addf %5, %6 : vector<8x64xf32>
    %c0_6 = arith.constant 0 : index
    %c0_7 = arith.constant 0 : index
    %8 = vector.load %arg7[%c0_6, %c0_7] : memref<8x64xf32, #tpu.memory_space<vmem>>, vector<8x64xf32>
    tpu.vector_store %arg7[%c0_6, %c0_7], %7 {strides = array<i32>} : memref<8x64xf32, #tpu.memory_space<vmem>>, vector<8x64xf32>,
    %c0_i32_8 = arith.constant 0 : i32
    %9 = arith.cmpi eq, %arg2, %c0_i32_8 : i32
    %10 = arith.extui %9 : i1 to i32
    %c0_i32_9 = arith.constant 0 : i32
    %11 = arith.cmpi ne, %10, %c0_i32_9 : i32
    scf.if %11 {
      %c0_10 = arith.constant 0 : index
      %c0_11 = arith.constant 0 : index
      %12 = vector.load %arg7[%c0_10, %c0_11] : memref<8x64xf32, #tpu.memory_space<vmem>>, vector<8x64xf32>
      %c0_12 = arith.constant 0 : index
      %c0_13 = arith.constant 0 : index
      %13 = vector.load %arg5[%c0_12, %c0_13] : memref<1x64xf32, #tpu.memory_space<vmem>>, vector<1x64xf32>
      %14 = vector.broadcast %13 : vector<1x64xf32> to vector<8x64xf32>
      %15 = arith.addf %12, %14 : vector<8x64xf32>
      %c0_14 = arith.constant 0 : index
      %c0_15 = arith.constant 0 : index
      %16 = vector.load %arg6[%c0_14, %c0_15] : memref<8x64xf32, #tpu.memory_space<vmem>>, vector<8x64xf32>
      tpu.vector_store %arg6[%c0_14, %c0_15], %15 {strides = array<i32>} : memref<8x64xf32, #tpu.memory_space<vmem>>, vector<8x64xf32>,
    } else {
    }
    return
  }
  func.func @transform_0(%arg0: i32, %arg1: i32, %arg2: i32) -> (i32, i32) {
    %c0_i32 = arith.constant 0 : i32
    return %arg1, %arg2 : i32, i32
  }
  func.func @transform_1(%arg0: i32, %arg1: i32, %arg2: i32) -> (i32, i32) {
    %c0_i32 = arith.constant 0 : i32
    return %arg0, %arg2 : i32, i32
  }
  func.func @transform_2(%arg0: i32, %arg1: i32, %arg2: i32) -> (i32, i32) {
    %c0_i32 = arith.constant 0 : i32
    %c0_i32_0 = arith.constant 0 : i32
    return %c0_i32, %arg0 : i32, i32
  }
  func.func @transform_3(%arg0: i32, %arg1: i32, %arg2: i32) -> (i32, i32) {
    %c0_i32 = arith.constant 0 : i32
    return %arg1, %arg0 : i32, i32
  }
}

</mosaic_0001>

<llo_original>
// kernel: tpu_custom_call.1
$region0: #{tpu_custom_call.1}
  #allocation0 [shape = 'u32[]', space=smem, size = 0x4, offset = 0x4, fixed_abs, tag = 'smem constant byte address 0x4 - core index']
  #allocation1 [shape = 'u32[144,128]{1,0:T(1,128)}', space=vmem, size = 0x12000, scoped, tag = 'internal scratch']
  #allocation2 [shape = 'f32[8,64]{1,0:T(8,128)}', space=vmem, size = 0x1000, scoped, tag = 'scratch operand']
  %s0 = inlined_call_operand.vmem [shape: f32[8,32], index: 0, kind: input, shape index: {}]
  %s1 = inlined_call_operand.vmem [shape: f32[64,32], index: 1, kind: input, shape index: {}]
  %s2 = inlined_call_operand.vmem [shape: f32[1,64], index: 2, kind: input, shape index: {}]
  %s3 = inlined_call_operand.hbm [shape: f32[8,64], index: 3, kind: output, shape index: {}]
  %s4 = sld [smem:[#allocation0]]
  $region30: #{tpu_custom_call.1} parent=0
    _
  %s6 = ssub.s32 1, %s4
  %s7 = scalar_select 0, %s6, %s4
  $region1: #{tpu_custom_call.1} parent=0
    #allocation3 [shape = 'u8[4096]{0}', space=vmem, size = 0x1000, scoped, tag = 'output window, operand 0, single buffered']
    #allocation4 [shape = 's32[1]{0}', space=sflag, size = 0x4, scoped, tag = 'scoped memory for tpu_custom_call.1']
    %8 = vsyncpa [#allocation4], 0
    // Predicated region
    $region2: #{tpu_custom_call.1} parent=1 // pred_check
      _
    $region3: #{tpu_custom_call.1} parent=1 // pred_check_branch
      %10 = sbr.rel (0) target = $region5
    $region4: #{tpu_custom_call.1} parent=1 // pred_region
      _
    $region5: #{tpu_custom_call.1} parent=1 // pred_fallthru
      _
    // Predicated region
    $region6: #{tpu_custom_call.1} parent=1 // pred_check
      _
    $region7: #{tpu_custom_call.1} parent=1 // pred_check_branch
      %12 = sbr.rel (0) target = $region9
    $region8: #{tpu_custom_call.1} parent=1 // pred_region
      _
    $region9: #{tpu_custom_call.1} parent=1 // pred_fallthru
      _
    // Predicated region
    $region10: #{tpu_custom_call.1} parent=1 // pred_check
      _
    $region11: #{tpu_custom_call.1} parent=1 // pred_check_branch
      %14 = sbr.rel (0) target = $region13
    $region12: #{tpu_custom_call.1} parent=1 // pred_region
      _
    $region13: #{tpu_custom_call.1} parent=1 // pred_fallthru
      _
    %p15 = scmp.eq.s32.totalorder 0, 0
    // Predicated region
    $region14: #{tpu_custom_call.1} parent=1 // pred_check
      %p16 = pneg %p15
    $region15: #{tpu_custom_call.1} parent=1 // pred_check_branch
      %18 = sbr.rel (%p16) target = $region17
    $region16: #{tpu_custom_call.1} parent=1 // pred_region
      %vm19 = vcmask 523264
      %20 = vst.msk [vmem:[#allocation2] sm:$0xff] %vm19, 0.0
    $region17: #{tpu_custom_call.1} parent=1 // pred_fallthru
      _
    %v21 = vld [vmem:[%s0] sm:$0xff]
    %v22 = vld [vmem:[%s1] sm:$0xff]
    %v23 = vld [vmem:[%s1 + $0x8] sm:$0xff]
    %v24 = vld [vmem:[%s1 + $0x10] sm:$0xff]
    %v25 = vld [vmem:[%s1 + $0x18] sm:$0xff]
    %v26 = vld [vmem:[%s1 + $0x20] sm:$0xff]
    %v27 = vld [vmem:[%s1 + $0x28] sm:$0xff]
    %v28 = vld [vmem:[%s1 + $0x30] sm:$0xff]
    %v29 = vld [vmem:[%s1 + $0x38] sm:$0xff]
    %v30 = vld [vmem:[#allocation2] sm:$0xff]
    %vm31 = vcmask 261120
    %v33 = vsel %vm31, %v21, 0
    %v36 = vsel %vm31, %v22, 0
    %v39 = vsel %vm31, %v23, 0
    %v42 = vsel %vm31, %v24, 0
    %v45 = vsel %vm31, %v25, 0
    %v48 = vsel %vm31, %v26, 0
    %v51 = vsel %vm31, %v27, 0
    %v54 = vsel %vm31, %v28, 0
    %v57 = vsel %vm31, %v29, 0
    %59 = vmatprep.subr.mxu0 0.0
    %60 = vmatpush1.xpose.msra.mxu0 %v36
    %61 = vmatprep.subr.mxu0 0.0
    %62 = vmatpush1.xpose.msra.mxu0 %v39
    %63 = vmatprep.subr.mxu0 0.0
    %64 = vmatpush1.xpose.msra.mxu0 %v42
    %65 = vmatprep.subr.mxu0 0.0
    %66 = vmatpush1.xpose.msra.mxu0 %v45
    %67 = vmatprep.subr.mxu0 0.0
    %68 = vmatpush1.xpose.msra.mxu0 %v48
    %69 = vmatprep.subr.mxu0 0.0
    %70 = vmatpush1.xpose.msra.mxu0 %v51
    %71 = vmatprep.subr.mxu0 0.0
    %72 = vmatpush1.xpose.msra.mxu0 %v54
    %73 = vmatprep.subr.mxu0 0.0
    %74 = vmatpush1.xpose.msra.mxu0 %v57
    %75 = vmatprep.subr.mxu0 0.0
    %76 = vmatpush1.xpose.msra.mxu0 0.0
    %77 = vmatprep.subr.mxu0 0.0
    %78 = vmatpush1.xpose.msra.mxu0 0.0
    %79 = vmatprep.subr.mxu0 0.0
    %80 = vmatpush1.xpose.msra.mxu0 0.0
    %81 = vmatprep.subr.mxu0 0.0
    %82 = vmatpush1.xpose.msra.mxu0 0.0
    %83 = vmatprep.subr.mxu0 0.0
    %84 = vmatpush1.xpose.msra.mxu0 0.0
    %85 = vmatprep.subr.mxu0 0.0
    %86 = vmatpush1.xpose.msra.mxu0 0.0
    %87 = vmatprep.subr.mxu0 0.0
    %88 = vmatpush1.xpose.msra.mxu0 0.0
    %89 = vmatprep.subr.mxu0 0.0
    %90 = vmatpush1.xpose.msra.mxu0 0.0
    %91 = vmatprep.subr.mxu0 0.0
    %92 = vmatpush1.xpose.msra.mxu0 0.0
    %93 = vmatprep.subr.mxu0 0.0
    %94 = vmatpush1.xpose.msra.mxu0 0.0
    %95 = vmatprep.subr.mxu0 0.0
    %96 = vmatpush1.xpose.msra.mxu0 0.0
    %97 = vmatprep.subr.mxu0 0.0
    %98 = vmatpush1.xpose.msra.mxu0 0.0
    %99 = vmatprep.subr.mxu0 0.0
    %100 = vmatpush1.xpose.msra.mxu0 0.0
    %101 = vmatprep.subr.mxu0 0.0
    %102 = vmatpush1.xpose.msra.mxu0 0.0
    %103 = vmatprep.subr.mxu0 0.0
    %104 = vmatpush1.xpose.msra.mxu0 0.0
    %105 = vmatprep.subr.mxu0 0.0
    %106 = vmatpush1.xpose.msra.mxu0 0.0
    %107 = vmatprep.subr.mxu0 0.0
    %108 = vmatpush1.xpose.msra.mxu0 0.0
    %109 = vmatprep.subr.mxu0 0.0
    %110 = vmatpush1.xpose.msra.mxu0 0.0
    %111 = vmatprep.subr.mxu0 0.0
    %112 = vmatpush1.xpose.msra.mxu0 0.0
    %113 = vmatprep.subr.mxu0 0.0
    %114 = vmatpush1.xpose.msra.mxu0 0.0
    %115 = vmatprep.subr.mxu0 0.0
    %116 = vmatpush1.xpose.msra.mxu0 0.0
    %117 = vmatprep.subr.mxu0 0.0
    %118 = vmatpush1.xpose.msra.mxu0 0.0
    %119 = vmatprep.subr.mxu0 0.0
    %120 = vmatpush1.xpose.msra.mxu0 0.0
    %121 = vmatprep.subr.mxu0 0.0
    %122 = vmatpush1.xpose.msra.mxu0 0.0
    %123 = vmatprep.mubr.f32.mxu0 0.0
    %124 = vmatmul.mubr.f32.gmra.mrb[0].mxu0 %v33
    %v125 = vpop.f32.mrb[0].mxu0
    %v126 = vadd.f32 0.0, %v125
    %v127 = vpop.f32.mrb[0].mxu0
    %128 = vdwg.mxu0
    %v129 = vadd.f32 %v30, %v126
    %vm130 = vcmask 523264
    %131 = vst.msk [vmem:[#allocation2] sm:$0xff] %vm130, %v129
    // Predicated region
    $region18: #{tpu_custom_call.1} parent=1 // pred_check
      %p132 = pneg %p15
    $region19: #{tpu_custom_call.1} parent=1 // pred_check_branch
      %134 = sbr.rel (%p132) target = $region21
    $region20: #{tpu_custom_call.1} parent=1 // pred_region
      %v135 = vld [vmem:[#allocation2] sm:$0xff]
      %v136 = vld [vmem:[%s2] sm:$0x1]
      %v138 = vlaneseq
      %v139 = vshrl.u32 %v138, 7
      %v140 = vsub.s32 0, %v139
      %v141 = vrot.slane %v136, %v140
      %v143 = vadd.f32 %v135, %v141
      %144 = vst.msk [vmem:[#allocation3] sm:$0xff] %vm130, %v143
    $region21: #{tpu_custom_call.1} parent=1 // pred_fallthru
      _
    // Predicated region
    $region22: #{tpu_custom_call.1} parent=1 // pred_check
      _
    $region23: #{tpu_custom_call.1} parent=1 // pred_check_branch
      %146 = sbr.rel (0) target = $region25
    $region24: #{tpu_custom_call.1} parent=1 // pred_region
      %s148 = ssub.s32 128, 128
      %149 = vsyncadd [#allocation4], %s148
      %s151 = sshll.u32 [#allocation3], 4
      %s152 = int_to_ptr.vmem [resolvable:$true] %s151
      %154 = dma.vmem_to_hbm [thread:$0]  %s152, 128, %s3, [#allocation4]
    $region25: #{tpu_custom_call.1} parent=1 // pred_fallthru
      _
    // Predicated region
    $region26: #{tpu_custom_call.1} parent=1 // pred_check
      _
    $region27: #{tpu_custom_call.1} parent=1 // pred_check_branch
      %156 = sbr.rel (0) target = $region29
    $region28: #{tpu_custom_call.1} parent=1 // pred_region
      %157 = dma.done [#allocation4], 128
    $region29: #{tpu_custom_call.1} parent=1 // pred_fallthru
      _
    %158 = vsyncpa [#allocation4], 1

</llo_original>
